<compile_context>
chip_gen: v7x
topology: tpu7x:2x2x1
jax: 0.10.0
libtpu: 0.0.40
codegen_flags: <defaults>
</compile_context>

<pallas_src>
import jax
import jax.numpy as jnp
from jax import lax
from jax.experimental import pallas as pl
from jax.experimental.pallas import tpu as pltpu


# ----------------------------------------------------------------------------
# Parameter / kernel construction (host-side glue) — mirrors get_gaussian_kernel1d
# ----------------------------------------------------------------------------
def _round_up(n: int, m: int) -> int:
    return ((n + m - 1) // m) * m


def gaussian_kernel1d(sigma: float, dx: float = 1.0, kernel_reach: int = 6):
    s = kernel_reach * 2
    ks = max(s, int(sigma * s / dx))
    ks = ks + (1 - ks % 2)  # force odd
    x = jnp.arange(ks, dtype=jnp.float32) - (ks // 2)
    if ks % 2 == 0:
        x = x + 0.5
    k = jnp.exp(-(x ** 2) / (2.0 * float(sigma) ** 2))
    k = k / jnp.sum(k)  # L1 normalized
    return k, ks


def band_matrix_square(g: jnp.ndarray, n: int) -> jnp.ndarray:
    """M[i, j] = g[j - i + K//2] if in range else 0.  Shape (n, n).

    This is the (n, n+K-1) 'same'-correlation Toeplitz band with its K//2
    leading/trailing columns cropped: under border_type='constant' those
    columns only multiply the zero padding, so the crop is exact.
    """
    K = g.shape[0]
    r = K // 2
    rows = jnp.arange(n)[:, None]
    cols = jnp.arange(n)[None, :]
    idx = cols - rows + r
    valid = (idx >= 0) & (idx < K)
    return jnp.where(valid, g[jnp.clip(idx, 0, K - 1)], 0.0).astype(jnp.float32)


# ----------------------------------------------------------------------------
# Pallas kernel: per (batch, channel) slice — two MXU matmuls.
# ----------------------------------------------------------------------------
def _avng_kernel(x_ref, a_ref, bt_ref, o_ref):
    # x_ref : (Hp, Wp)  input slice (zero-padded only up to lane/sublane multiples)
    # a_ref : (Hp, Hp)  per-channel row band matrix (sigma_pixel[c]^2 folded in)
    # bt_ref: (Wp, Wp)  column band matrix, transposed
    # o_ref : (Hp, Wp)
    t = jnp.dot(a_ref[...], x_ref[...], preferred_element_type=jnp.float32)
    o_ref[...] = jnp.dot(t, bt_ref[...],
                         preferred_element_type=jnp.float32).astype(o_ref.dtype)


class VolNormalizedGaussianRKHSPallas:
    def __init__(self, sigma, dx=(1,), border_type="constant", kernel_reach=6):
        self._dim = len(sigma)
        if self._dim != 2:
            raise ValueError("This Pallas port implements the 2D case only")
        if border_type != "constant":
            # TODO(synk): only 'constant' (zero) border implemented; other modes
            # cannot be folded into the cropped band matrices and would need an
            # explicit host-side pad with that mode.
            raise ValueError("only border_type='constant' supported")
        dxs = tuple(dx) * self._dim if len(dx) == 1 else tuple(dx)
        # sigma_convention='pixel'
        self.sigma_pixel = jnp.asarray(sigma, jnp.float32)
        self.sigma_cont = jnp.asarray([s * d for s, d in zip(sigma, dxs)], jnp.float32)

        # Kernel is built with sigma in pixel units and dx=1, exactly like
        # get_gaussian_kernel2d(self.sigma, kernel_reach=...) in the module.
        gh, self.kh = gaussian_kernel1d(float(sigma[0]), kernel_reach=kernel_reach)
        gw, self.kw = gaussian_kernel1d(float(sigma[1]), kernel_reach=kernel_reach)
        self.gh, self.gw = gh, gw
        # kernel /= prod(sigma_continuous), split across the two separable factors
        self.gh_s = gh / self.sigma_cont[0]
        self.gw_s = gw / self.sigma_cont[1]

    def __call__(self, x: jnp.ndarray) -> jnp.ndarray:
        B, C, H, W = x.shape
        assert C == self._dim, "channel count must equal len(sigma)"

        # Pad only to lane/sublane multiples (no-op for typical image sizes);
        # extra rows/cols are zeros, which is exactly the 'constant' border,
        # so the valid region of the output is untouched.
        Hp = _round_up(H, 8)
        Wp = _round_up(W, 128)
        needs_crop = (Hp, Wp) != (H, W)
        xp = x if not needs_crop else jnp.pad(
            x, ((0, 0), (0, 0), (0, Hp - H), (0, Wp - W)), mode="constant")

        sig2 = (self.sigma_pixel ** 2).astype(jnp.float32)          # (C,)
        a_base = band_matrix_square(self.gh_s, Hp)                   # (Hp, Hp)
        A = sig2[:, None, None] * a_base[None]                       # (C, Hp, Hp)
        Bt = band_matrix_square(self.gw_s, Wp).T                     # (Wp, Wp)

        # VMEM budget: double-buffered x/out/A/Bt blocks + the f32 intermediate.
        vmem_need = 4 * (2 * Hp * Wp * 2 + 2 * Hp * Hp + 2 * Wp * Wp + Hp * Wp)
        vmem_limit = int(min(max(vmem_need * 3 // 2, 32 << 20), 64 << 20))

        out = pl.pallas_call(
            _avng_kernel,
            out_shape=jax.ShapeDtypeStruct((B, C, Hp, Wp), x.dtype),
            grid=(B, C),
            in_specs=[
                pl.BlockSpec((pl.Squeezed(), pl.Squeezed(), Hp, Wp),
                             lambda b, c: (b, c, 0, 0)),             # x slice
                pl.BlockSpec((pl.Squeezed(), Hp, Hp),
                             lambda b, c: (c, 0, 0)),                # per-channel A
                pl.BlockSpec((Wp, Wp), lambda b, c: (0, 0)),         # B^T (shared)
            ],
            out_specs=pl.BlockSpec((pl.Squeezed(), pl.Squeezed(), Hp, Wp),
                                   lambda b, c: (b, c, 0, 0)),
            compiler_params=pltpu.CompilerParams(
                dimension_semantics=("parallel", "parallel"),
                vmem_limit_bytes=vmem_limit,
            ),
        )(xp, A, Bt)

        if needs_crop:
            out = out[:, :, :H, :W]
        return out


# ----------------------------------------------------------------------------
# Reference (plain JAX) for a correctness check, mirroring fft_filter semantics.
# ----------------------------------------------------------------------------
def reference_forward(module: VolNormalizedGaussianRKHSPallas, x: jnp.ndarray):
    B, C, H, W = x.shape
    k2d = jnp.outer(module.gh, module.gw) / (module.sigma_cont[0] * module.sigma_cont[1])
    k = jnp.tile(k2d[None, None], (C, 1, 1, 1))  # depthwise (C,1,kH,kW)
    pad_h, pad_w = module.kh // 2, module.kw // 2
    y = lax.conv_general_dilated(
        x, k, window_strides=(1, 1),
        padding=((pad_h, pad_h), (pad_w, pad_w)),
        feature_group_count=C,
        dimension_numbers=("NCHW", "OIHW", "NCHW"),
    )
    return y * (module.sigma_pixel ** 2)[None, :, None, None]


if __name__ == "__main__":
    key = jax.random.PRNGKey(0)
    B, C, H, W = 2, 2, 16, 16            # C == len(sigma) == 2 (vector field)
    sigma = (2.0, 1.0)
    x = jax.random.normal(key, (B, C, H, W), dtype=jnp.float32)

    module = VolNormalizedGaussianRKHSPallas(sigma=sigma, dx=(1,),
                                             border_type="constant", kernel_reach=6)
    out = jax.block_until_ready(module(x))
    ref = jax.block_until_ready(reference_forward(module, x))

    assert out.shape == (B, C, H, W) and out.dtype == jnp.float32
    max_err = float(jnp.max(jnp.abs(out - ref)))
    assert jnp.allclose(out, ref, rtol=1e-4, atol=1e-5), max_err

    print("KERNEL_OK")
</pallas_src>

<mosaic_0001>
module attributes {stable_mosaic.version = 11 : i64} {
  func.func @_avng_kernel(%arg0: i32, %arg1: i32, %arg2: memref<1x1x16x128xf32, #tpu.memory_space<vmem>>, %arg3: memref<1x16x16xf32, #tpu.memory_space<vmem>>, %arg4: memref<128x128xf32, #tpu.memory_space<vmem>>, %arg5: memref<1x1x16x128xf32, #tpu.memory_space<vmem>>) attributes {dimension_semantics = [#tpu.dimension_semantics<parallel>, #tpu.dimension_semantics<parallel>], iteration_bounds = array<i64: 2, 2>, scalar_prefetch = 0 : i64, scratch_operands = 0 : i64, tpu.core_type = #tpu.core_type<tc>, window_params = [{transform_indices = @transform_0, window_bounds = array<i64: 1, 1, 16, 128>}, {transform_indices = @transform_1, window_bounds = array<i64: 1, 16, 16>}, {pipeline_mode = #tpu.pipeline_mode<synchronous>, transform_indices = @transform_2, window_bounds = array<i64: 128, 128>}, {transform_indices = @transform_3, window_bounds = array<i64: 1, 1, 16, 128>}]} {
    %c0 = arith.constant 0 : index
    %c0_0 = arith.constant 0 : index
    %c0_1 = arith.constant 0 : index
    %0 = vector.load %arg3[%c0, %c0_0, %c0_1] : memref<1x16x16xf32, #tpu.memory_space<vmem>>, vector<1x16x16xf32>
    %1 = vector.shape_cast %0 : vector<1x16x16xf32> to vector<16x16xf32>
    %c0_2 = arith.constant 0 : index
    %c0_3 = arith.constant 0 : index
    %c0_4 = arith.constant 0 : index
    %c0_5 = arith.constant 0 : index
    %2 = vector.load %arg2[%c0_2, %c0_3, %c0_4, %c0_5] : memref<1x1x16x128xf32, #tpu.memory_space<vmem>>, vector<1x1x16x128xf32>
    %3 = vector.shape_cast %2 : vector<1x1x16x128xf32> to vector<16x128xf32>
    %cst = arith.constant dense<0.000000e+00> : vector<16x128xf32>
    %4 = tpu.matmul %1, %3, %cst {dimension_numbers = #tpu.dot_dimension_numbers<[1], [0], [0], [1], [0, 0, 1, 1], [], []>} : vector<16x16xf32>, vector<16x128xf32>, vector<16x128xf32> -> vector<16x128xf32>
    %c0_6 = arith.constant 0 : index
    %c0_7 = arith.constant 0 : index
    %5 = vector.load %arg4[%c0_6, %c0_7] : memref<128x128xf32, #tpu.memory_space<vmem>>, vector<128x128xf32>
    %cst_8 = arith.constant dense<0.000000e+00> : vector<16x128xf32>
    %6 = tpu.matmul %4, %5, %cst_8 {dimension_numbers = #tpu.dot_dimension_numbers<[1], [0], [0], [1], [0, 0, 1, 1], [], []>} : vector<16x128xf32>, vector<128x128xf32>, vector<16x128xf32> -> vector<16x128xf32>
    %c0_9 = arith.constant 0 : index
    %c0_10 = arith.constant 0 : index
    %c0_11 = arith.constant 0 : index
    %c0_12 = arith.constant 0 : index
    %7 = vector.load %arg5[%c0_9, %c0_10, %c0_11, %c0_12] : memref<1x1x16x128xf32, #tpu.memory_space<vmem>>, vector<1x1x16x128xf32>
    %8 = vector.shape_cast %7 : vector<1x1x16x128xf32> to vector<16x128xf32>
    %9 = vector.shape_cast %6 : vector<16x128xf32> to vector<1x1x16x128xf32>
    tpu.vector_store %arg5[%c0_9, %c0_10, %c0_11, %c0_12], %9 {strides = array<i32>} : memref<1x1x16x128xf32, #tpu.memory_space<vmem>>, vector<1x1x16x128xf32>,
    return
  }
  func.func @transform_0(%arg0: i32, %arg1: i32) -> (i32, i32, i32, i32) {
    %c0_i32 = arith.constant 0 : i32
    %c0_i32_0 = arith.constant 0 : i32
    %c0_i32_1 = arith.constant 0 : i32
    return %arg0, %arg1, %c0_i32, %c0_i32_0 : i32, i32, i32, i32
  }
  func.func @transform_1(%arg0: i32, %arg1: i32) -> (i32, i32, i32) {
    %c0_i32 = arith.constant 0 : i32
    %c0_i32_0 = arith.constant 0 : i32
    %c0_i32_1 = arith.constant 0 : i32
    return %arg1, %c0_i32, %c0_i32_0 : i32, i32, i32
  }
  func.func @transform_2(%arg0: i32, %arg1: i32) -> (i32, i32) {
    %c0_i32 = arith.constant 0 : i32
    %c0_i32_0 = arith.constant 0 : i32
    %c0_i32_1 = arith.constant 0 : i32
    return %c0_i32, %c0_i32_0 : i32, i32
  }
  func.func @transform_3(%arg0: i32, %arg1: i32) -> (i32, i32, i32, i32) {
    %c0_i32 = arith.constant 0 : i32
    %c0_i32_0 = arith.constant 0 : i32
    %c0_i32_1 = arith.constant 0 : i32
    return %arg0, %arg1, %c0_i32, %c0_i32_0 : i32, i32, i32, i32
  }
}

</mosaic_0001>

<llo_original>
// kernel: tpu_custom_call.1
$region0: #{tpu_custom_call.1}
  #allocation0 [shape = 'u32[]', space=smem, size = 0x4, offset = 0x4, fixed_abs, tag = 'smem constant byte address 0x4 - core index']
  #allocation1 [shape = 'u32[144,128]{1,0:T(1,128)}', space=vmem, size = 0x12000, scoped, tag = 'internal scratch']
  %s0 = inlined_call_operand.hbm [shape: f32[2,2,16,128], index: 0, kind: input, shape index: {}]
  %s1 = inlined_call_operand.hbm [shape: f32[2,16,16], index: 1, kind: input, shape index: {}]
  %s2 = inlined_call_operand.hbm [shape: f32[128,128], index: 2, kind: input, shape index: {}]
  %s3 = inlined_call_operand.hbm [shape: f32[2,2,16,128], index: 3, kind: output, shape index: {}]
  %s4 = sld [smem:[#allocation0]]
  $region57: #{tpu_custom_call.1} parent=0
    _
  %s6 = ssub.s32 1, %s4
  %s7 = scalar_select 0, %s6, %s4
  $region1: #{tpu_custom_call.1} parent=0
    #allocation2 [shape = 'u8[16384]{0}', space=vmem, size = 0x4000, scoped, tag = 'input window, operand 0']
    #allocation3 [shape = 's32[2]{0}', space=sflag, size = 0x8, scoped, tag = 'scoped memory for tpu_custom_call.1']
    #allocation4 [shape = 's32[2]{0}', space=sflag, size = 0x8, scoped, tag = 'scoped memory for tpu_custom_call.1']
    #allocation5 [shape = 'u8[16384]{0}', space=vmem, size = 0x4000, scoped, tag = 'input window, operand 1']
    #allocation6 [shape = 's32[2]{0}', space=sflag, size = 0x8, scoped, tag = 'scoped memory for tpu_custom_call.1']
    #allocation7 [shape = 'u8[65536]{0}', space=vmem, size = 0x10000, scoped, tag = 'input window, operand 2, single buffered']
    #allocation8 [shape = 'u8[16384]{0}', space=vmem, size = 0x4000, scoped, tag = 'output window, operand 0']
    %8 = vsyncpa [#allocation3], 0
    %s9 = scalar_lea.sflag [#allocation3], 1
    %10 = vsyncpa %s9, 0
    %11 = vsyncpa [#allocation6], 0
    %s12 = scalar_lea.sflag [#allocation6], 1
    %13 = vsyncpa %s12, 0
    %14 = vsyncpa [#allocation4], 0
    %s15 = scalar_lea.sflag [#allocation4], 1
    %16 = vsyncpa %s15, 0
    loop: start=0, step=1, limit=6
    $region2: #{tpu_custom_call.1} parent=1 // loop_pre_header
      _
    $region3: #{tpu_custom_call.1} parent=1 // loop_header
      %s18 = sphi 0, %s22
      %p19 = scmp.ge.s32.totalorder %s18, 6
      %s25 = sphi 0, %s37
      %s26 = sphi 0, %s33
      %s27 = sphi 0, %s25
      %s28 = sphi 0, %s26
      %s29 = sphi 0, %s27
      %s30 = sphi 0, %s28
      %s42 = sphi 0, %s44
      %s45 = sphi 0, %s42
      %s46 = sphi 0, %s45
      %s62 = sphi 0, %s46
      %s68 = sphi 0, %s70
      %s71 = sphi 0, %s68
      %s72 = sphi 0, %s71
      %s88 = sphi 0, %s72
      %s92 = sphi 0, %s92
      %s94 = sphi 0, %s92
      %s95 = sphi 0, %s94
      %s109 = sphi 0, %s95
      %s117 = sphi 0, %s119
      %s120 = sphi 0, %s117
      %s121 = sphi 0, %s120
      %s137 = sphi 0, %s121
    $region4: #{tpu_custom_call.1} parent=1 // loop_header_branch
      %21 = sbr.rel (%p19) target = $region8
    $region5: #{tpu_custom_call.1} parent=1 // loop_body
      %s23 = ssub.s32 %s18, 1
      %s24 = ssub.s32 %s18, 2
      %s31 = sadd.s32 1, %s26
      %p32 = scmp.ge.s32.totalorder %s31, 2
      %s33 = scalar_select %p32, 0, %s31
      %s34 = sadd.s32 1, %s25
      %s35 = scalar_select %p32, %s34, %s25
      %p36 = scmp.ge.s32.totalorder %s35, 2
      %s37 = scalar_select %p36, 0, %s35
      %s38 = ssub.s32 %s25, %s37
      %s39 = ssub.s32 %s26, %s33
      %s40 = sor.u32 %s38, %s39
      %p41 = scmp.eq.s32.totalorder %s40, 0
      %s43 = sadd.s32 %s42, 1
      %s44 = scalar_select %p41, %s42, %s43
      %p47 = pneg %p41
      %p48 = scmp.eq.s32.totalorder %s18, 3
      %p49 = por %p47, %p48
      %p50 = scmp.ne.s32.totalorder %s42, %s45
      %p51 = scmp.eq.s32.totalorder %s18, 0
      %p52 = por %p50, %p51
      %p53 = scmp.ne.s32.totalorder %s42, %s45
      %p54 = scmp.eq.s32.totalorder %s23, 3
      %p55 = por %p53, %p54
      %p56 = scmp.ne.s32.totalorder %s45, %s46
      %p57 = scmp.eq.s32.totalorder %s23, 0
      %p58 = por %p56, %p57
      %p59 = scmp.ne.s32.totalorder %s45, %s46
      %p60 = scmp.eq.s32.totalorder %s24, 3
      %p61 = por %p59, %p60
      %p63 = scmp.ne.s32.totalorder %s46, %s62
      %p64 = scmp.eq.s32.totalorder %s24, 0
      %p65 = por %p63, %p64
      %s66 = ssub.s32 %s26, %s33
      %p67 = scmp.eq.s32.totalorder %s66, 0
      %s69 = sadd.s32 %s68, 1
      %s70 = scalar_select %p67, %s68, %s69
      %p73 = pneg %p67
      %p74 = scmp.eq.s32.totalorder %s18, 3
      %p75 = por %p73, %p74
      %p76 = scmp.ne.s32.totalorder %s68, %s71
      %p77 = scmp.eq.s32.totalorder %s18, 0
      %p78 = por %p76, %p77
      %p79 = scmp.ne.s32.totalorder %s68, %s71
      %p80 = scmp.eq.s32.totalorder %s23, 3
      %p81 = por %p79, %p80
      %p82 = scmp.ne.s32.totalorder %s71, %s72
      %p83 = scmp.eq.s32.totalorder %s23, 0
      %p84 = por %p82, %p83
      %p85 = scmp.ne.s32.totalorder %s71, %s72
      %p86 = scmp.eq.s32.totalorder %s24, 3
      %p87 = por %p85, %p86
      %p89 = scmp.ne.s32.totalorder %s72, %s88
      %p90 = scmp.eq.s32.totalorder %s24, 0
      %p91 = por %p89, %p90
      %s93 = sadd.s32 %s92, 1
      %p96 = scmp.eq.s32.totalorder %s18, 3
      %p97 = scmp.ne.s32.totalorder %s92, %s94
      %p98 = scmp.eq.s32.totalorder %s18, 0
      %p99 = por %p97, %p98
      %p100 = scmp.ne.s32.totalorder %s92, %s94
      %p101 = scmp.eq.s32.totalorder %s23, 3
      %p102 = por %p100, %p101
      %p103 = scmp.ne.s32.totalorder %s94, %s95
      %p104 = scmp.eq.s32.totalorder %s23, 0
      %p105 = por %p103, %p104
      %p106 = scmp.ne.s32.totalorder %s94, %s95
      %p107 = scmp.eq.s32.totalorder %s24, 3
      %p108 = por %p106, %p107
      %p110 = scmp.ne.s32.totalorder %s95, %s109
      %p111 = scmp.eq.s32.totalorder %s24, 0
      %p112 = por %p110, %p111
      %s113 = ssub.s32 %s25, %s37
      %s114 = ssub.s32 %s26, %s33
      %s115 = sor.u32 %s113, %s114
      %p116 = scmp.eq.s32.totalorder %s115, 0
      %s118 = sadd.s32 %s117, 1
      %s119 = scalar_select %p116, %s117, %s118
      %p122 = pneg %p116
      %p123 = scmp.eq.s32.totalorder %s18, 3
      %p124 = por %p122, %p123
      %p125 = scmp.ne.s32.totalorder %s117, %s120
      %p126 = scmp.eq.s32.totalorder %s18, 0
      %p127 = por %p125, %p126
      %p128 = scmp.ne.s32.totalorder %s117, %s120
      %p129 = scmp.eq.s32.totalorder %s23, 3
      %p130 = por %p128, %p129
      %p131 = scmp.ne.s32.totalorder %s120, %s121
      %p132 = scmp.eq.s32.totalorder %s23, 0
      %p133 = por %p131, %p132
      %p134 = scmp.ne.s32.totalorder %s120, %s121
      %p135 = scmp.eq.s32.totalorder %s24, 3
      %p136 = por %p134, %p135
      %p138 = scmp.ne.s32.totalorder %s121, %s137
      %p139 = scmp.eq.s32.totalorder %s24, 0
      %p140 = por %p138, %p139
      %p141 = scmp.le.s32.totalorder 1, %s18
      %p142 = scmp.lt.s32.totalorder %s18, 5
      %p143 = pnand %p141, %p142
      %p144 = pneg %p143
      // Predicated region
      $region9: #{tpu_custom_call.1} parent=5 // pred_check
        _
      $region10: #{tpu_custom_call.1} parent=5 // pred_check_branch
        %146 = sbr.rel (%p143) target = $region12
      $region11: #{tpu_custom_call.1} parent=5 // pred_region
        %s147 = ssub.s32 %s18, 1
        // Predicated region
        $region13: #{tpu_custom_call.1} parent=11 // pred_check
          %p148 = pneg %p105
        $region14: #{tpu_custom_call.1} parent=11 // pred_check_branch
          %150 = sbr.rel (%p148) target = $region16
        $region15: #{tpu_custom_call.1} parent=11 // pred_region
          %s152 = ssub.s32 2048, 2048
          %153 = vsyncadd [#allocation6], %s152
          %s154 = sshll.u32 [#allocation7], 4
          %s155 = int_to_ptr.vmem [resolvable:$true] %s154
          %160 = dma.hbm_to_vmem [thread:$0]  %s2, 2048, %s155, [#allocation6], 128, 128, 8
        $region16: #{tpu_custom_call.1} parent=11 // pred_fallthru
          _
      $region12: #{tpu_custom_call.1} parent=5 // pred_fallthru
        _
      %p161 = scmp.lt.s32.totalorder %s18, 4
      // Predicated region
      $region17: #{tpu_custom_call.1} parent=5 // pred_check
        %p162 = pneg %p161
      $region18: #{tpu_custom_call.1} parent=5 // pred_check_branch
        %164 = sbr.rel (%p162) target = $region20
      $region19: #{tpu_custom_call.1} parent=5 // pred_region
        // Predicated region
        $region21: #{tpu_custom_call.1} parent=19 // pred_check
          %p165 = pneg %p52
        $region22: #{tpu_custom_call.1} parent=19 // pred_check_branch
          %167 = sbr.rel (%p165) target = $region24
        $region23: #{tpu_custom_call.1} parent=19 // pred_region
          %s168 = sand.u32 %s42, 1
          %s169 = scalar_lea.sflag [#allocation3], %s168
          %s170 = sand.u32 %s42, 1
          %s171 = smul.addr %s170, 16
          %s172 = scalar_lea.vmem [#allocation2], %s171
          %s174 = ssub.s32 256, 256
          %175 = vsyncadd %s169, %s174
          %s176 = smul.addr %s26, 2
          %s177 = smul.addr %s25, 4
          %s178 = sadd.s32 %s176, %s177
          %s179 = smul.addr %s178, 128
          %s180 = scalar_lea.hbm %s0, %s179
          %s181 = sshll.u32 %s172, 4
          %s182 = int_to_ptr.vmem [resolvable:$true] %s181
          %187 = dma.hbm_to_vmem [thread:$0]  %s180, 256, %s182, %s169, 128, 128, 8
        $region24: #{tpu_custom_call.1} parent=19 // pred_fallthru
          _
        // Predicated region
        $region25: #{tpu_custom_call.1} parent=19 // pred_check
          %p188 = pneg %p78
        $region26: #{tpu_custom_call.1} parent=19 // pred_check_branch
          %190 = sbr.rel (%p188) target = $region28
        $region27: #{tpu_custom_call.1} parent=19 // pred_region
          %s191 = sand.u32 %s18, 1
          %s192 = scalar_lea.sflag [#allocation6], %s191
          %s193 = sand.u32 %s68, 1
          %s194 = smul.addr %s193, 16
          %s195 = scalar_lea.vmem [#allocation5], %s194
          %s197 = ssub.s32 256, 256
          %198 = vsyncadd %s192, %s197
          %s199 = smul.addr %s26, 2
          %s200 = smul.addr %s199, 128
          %s201 = scalar_lea.hbm %s1, %s200
          %s202 = sshll.u32 %s195, 4
          %s203 = int_to_ptr.vmem [resolvable:$true] %s202
          %208 = dma.hbm_to_vmem [thread:$0]  %s201, 256, %s203, %s192, 128, 128, 8
        $region28: #{tpu_custom_call.1} parent=19 // pred_fallthru
          _
      $region20: #{tpu_custom_call.1} parent=5 // pred_fallthru
        _
      %p209 = scmp.le.s32.totalorder 1, %s18
      %p210 = scmp.lt.s32.totalorder %s18, 5
      %p211 = pnand %p209, %p210
      %p212 = pneg %p211
      // Predicated region
      $region29: #{tpu_custom_call.1} parent=5 // pred_check
        _
      $region30: #{tpu_custom_call.1} parent=5 // pred_check_branch
        %214 = sbr.rel (%p211) target = $region32
      $region31: #{tpu_custom_call.1} parent=5 // pred_region
        %s215 = ssub.s32 %s18, 1
        %s216 = sand.u32 %s45, 1
        %s217 = scalar_lea.sflag [#allocation3], %s216
        %s218 = sand.u32 %s45, 1
        %s219 = smul.addr %s218, 16
        %s220 = scalar_lea.vmem [#allocation2], %s219
        // Predicated region
        $region33: #{tpu_custom_call.1} parent=31 // pred_check
          %p221 = pneg %p58
        $region34: #{tpu_custom_call.1} parent=31 // pred_check_branch
          %223 = sbr.rel (%p221) target = $region36
        $region35: #{tpu_custom_call.1} parent=31 // pred_region
          %224 = dma.done %s217, 256
        $region36: #{tpu_custom_call.1} parent=31 // pred_fallthru
          _
        %s225 = sand.u32 %s23, 1
        %s226 = scalar_lea.sflag [#allocation6], %s225
        %s227 = sand.u32 %s71, 1
        %s228 = smul.addr %s227, 16
        %s229 = scalar_lea.vmem [#allocation5], %s228
        // Predicated region
        $region37: #{tpu_custom_call.1} parent=31 // pred_check
          %p230 = pneg %p84
        $region38: #{tpu_custom_call.1} parent=31 // pred_check_branch
          %232 = sbr.rel (%p230) target = $region40
        $region39: #{tpu_custom_call.1} parent=31 // pred_region
          %233 = dma.done %s226, 256
        $region40: #{tpu_custom_call.1} parent=31 // pred_fallthru
          _
        // Predicated region
        $region41: #{tpu_custom_call.1} parent=31 // pred_check
          %p234 = pneg %p105
        $region42: #{tpu_custom_call.1} parent=31 // pred_check_branch
          %236 = sbr.rel (%p234) target = $region44
        $region43: #{tpu_custom_call.1} parent=31 // pred_region
          %237 = dma.done [#allocation6], 2048
        $region44: #{tpu_custom_call.1} parent=31 // pred_fallthru
          _
        %s238 = sand.u32 %s45, 1
        %s239 = scalar_lea.sflag [#allocation3], %s238
        %s240 = sand.u32 %s45, 1
        %s241 = smul.addr %s240, 16
        %s242 = scalar_lea.vmem [#allocation2], %s241
        %p243 = pneg %p58
        %p244 = pneg %p55
        %s245 = sand.u32 %s23, 1
        %s246 = scalar_lea.sflag [#allocation6], %s245
        %s247 = sand.u32 %s71, 1
        %s248 = smul.addr %s247, 16
        %s249 = scalar_lea.vmem [#allocation5], %s248
        %p250 = pneg %p84
        %p251 = pneg %p81
        %p252 = pneg %p105
        %p253 = pneg %p102
        %p254 = pneg %p133
        %p255 = pneg %p130
        %s256 = sand.u32 %s120, 1
        %s257 = scalar_lea.sflag [#allocation4], %s256
        %s258 = sand.u32 %s120, 1
        %s259 = smul.addr %s258, 16
        %s260 = scalar_lea.vmem [#allocation8], %s259
        %v261 = vld [vmem:[%s229] sm:$0xff]
        %v262 = vld [vmem:[%s229 + $0x8] sm:$0xff]
        %v263 = vld [vmem:[%s220] sm:$0xff]
        %v264 = vld [vmem:[%s220 + $0x8] sm:$0xff]
        %vm265 = vcmask 130048
        %v267 = vsel %vm265, %v261, 0
        %v270 = vsel %vm265, %v262, 0
        %272 = vmatprep.subr.mxu0 0.0
        %273 = vmatpush1.msra.mxu0 %v263
        %274 = vmatprep.subr.mxu0 0.0
        %275 = vmatpush1.msra.mxu0 %v264
        %276 = vmatprep.subr.mxu0 0.0
        %277 = vmatpush1.msra.mxu0 0.0
        %278 = vmatprep.subr.mxu0 0.0
        %279 = vmatpush1.msra.mxu0 0.0
        %280 = vmatprep.subr.mxu0 0.0
        %281 = vmatpush1.msra.mxu0 0.0
        %282 = vmatprep.subr.mxu0 0.0
        %283 = vmatpush1.msra.mxu0 0.0
        %284 = vmatprep.subr.mxu0 0.0
        %285 = vmatpush1.msra.mxu0 0.0
        %286 = vmatprep.subr.mxu0 0.0
        %287 = vmatpush1.msra.mxu0 0.0
        %288 = vmatprep.subr.mxu0 0.0
        %289 = vmatpush1.msra.mxu0 0.0
        %290 = vmatprep.subr.mxu0 0.0
        %291 = vmatpush1.msra.mxu0 0.0
        %292 = vmatprep.subr.mxu0 0.0
        %293 = vmatpush1.msra.mxu0 0.0
        %294 = vmatprep.subr.mxu0 0.0
        %295 = vmatpush1.msra.mxu0 0.0
        %296 = vmatprep.subr.mxu0 0.0
        %297 = vmatpush1.msra.mxu0 0.0
        %298 = vmatprep.subr.mxu0 0.0
        %299 = vmatpush1.msra.mxu0 0.0
        %300 = vmatprep.subr.mxu0 0.0
        %301 = vmatpush1.msra.mxu0 0.0
        %302 = vmatprep.subr.mxu0 0.0
        %303 = vmatpush1.msra.mxu0 0.0
        %304 = vmatprep.subr.mxu0 0.0
        %305 = vmatpush1.msra.mxu0 0.0
        %306 = vmatprep.subr.mxu0 0.0
        %307 = vmatpush1.msra.mxu0 0.0
        %308 = vmatprep.subr.mxu0 0.0
        %309 = vmatpush1.msra.mxu0 0.0
        %310 = vmatprep.subr.mxu0 0.0
        %311 = vmatpush1.msra.mxu0 0.0
        %312 = vmatprep.subr.mxu0 0.0
        %313 = vmatpush1.msra.mxu0 0.0
        %314 = vmatprep.subr.mxu0 0.0
        %315 = vmatpush1.msra.mxu0 0.0
        %316 = vmatprep.subr.mxu0 0.0
        %317 = vmatpush1.msra.mxu0 0.0
        %318 = vmatprep.subr.mxu0 0.0
        %319 = vmatpush1.msra.mxu0 0.0
        %320 = vmatprep.subr.mxu0 0.0
        %321 = vmatpush1.msra.mxu0 0.0
        %322 = vmatprep.subr.mxu0 0.0
        %323 = vmatpush1.msra.mxu0 0.0
        %324 = vmatprep.subr.mxu0 0.0
        %325 = vmatpush1.msra.mxu0 0.0
        %326 = vmatprep.subr.mxu0 0.0
        %327 = vmatpush1.msra.mxu0 0.0
        %328 = vmatprep.subr.mxu0 0.0
        %329 = vmatpush1.msra.mxu0 0.0
        %330 = vmatprep.subr.mxu0 0.0
        %331 = vmatpush1.msra.mxu0 0.0
        %332 = vmatprep.subr.mxu0 0.0
        %333 = vmatpush1.msra.mxu0 0.0
        %334 = vmatprep.subr.mxu0 0.0
        %335 = vmatpush1.msra.mxu0 0.0
        %336 = vmatprep.mubr.f32.mxu0 0.0
        %337 = vmatmul.mubr.f32.gmra.mrb[0].mxu0 %v267
        %v338 = vpop.f32.mrb[0].mxu0
        %v339 = vadd.f32 0.0, %v338
        %v340 = vpop.f32.mrb[0].mxu0
        %341 = vmatprep.mubr.f32.mxu0 0.0
        %342 = vmatmul.mubr.f32.gmra.mrb[0].mxu0 %v270
        %v343 = vpop.f32.mrb[0].mxu0
        %v344 = vadd.f32 0.0, %v343
        %v345 = vpop.f32.mrb[0].mxu0
        %346 = vdwg.mxu0
        %v347 = vld [vmem:[#allocation7] sm:$0xff]
        %v348 = vld [vmem:[#allocation7 + $0x8] sm:$0xff]
        %v349 = vld [vmem:[#allocation7 + $0x10] sm:$0xff]
        %v350 = vld [vmem:[#allocation7 + $0x18] sm:$0xff]
        %v351 = vld [vmem:[#allocation7 + $0x20] sm:$0xff]
        %v352 = vld [vmem:[#allocation7 + $0x28] sm:$0xff]
        %v353 = vld [vmem:[#allocation7 + $0x30] sm:$0xff]
        %v354 = vld [vmem:[#allocation7 + $0x38] sm:$0xff]
        %v355 = vld [vmem:[#allocation7 + $0x40] sm:$0xff]
        %v356 = vld [vmem:[#allocation7 + $0x48] sm:$0xff]
        %v357 = vld [vmem:[#allocation7 + $0x50] sm:$0xff]
        %v358 = vld [vmem:[#allocation7 + $0x58] sm:$0xff]
        %v359 = vld [vmem:[#allocation7 + $0x60] sm:$0xff]
        %v360 = vld [vmem:[#allocation7 + $0x68] sm:$0xff]
        %v361 = vld [vmem:[#allocation7 + $0x70] sm:$0xff]
        %v362 = vld [vmem:[#allocation7 + $0x78] sm:$0xff]
        %363 = vmatprep.subr.mxu0 0.0
        %364 = vmatpush1.msra.mxu0 %v347
        %365 = vmatprep.subr.mxu0 0.0
        %366 = vmatpush1.msra.mxu0 %v348
        %367 = vmatprep.subr.mxu0 0.0
        %368 = vmatpush1.msra.mxu0 %v349
        %369 = vmatprep.subr.mxu0 0.0
        %370 = vmatpush1.msra.mxu0 %v350
        %371 = vmatprep.subr.mxu0 0.0
        %372 = vmatpush1.msra.mxu0 %v351
        %373 = vmatprep.subr.mxu0 0.0
        %374 = vmatpush1.msra.mxu0 %v352
        %375 = vmatprep.subr.mxu0 0.0
        %376 = vmatpush1.msra.mxu0 %v353
        %377 = vmatprep.subr.mxu0 0.0
        %378 = vmatpush1.msra.mxu0 %v354
        %379 = vmatprep.subr.mxu0 0.0
        %380 = vmatpush1.msra.mxu0 %v355
        %381 = vmatprep.subr.mxu0 0.0
        %382 = vmatpush1.msra.mxu0 %v356
        %383 = vmatprep.subr.mxu0 0.0
        %384 = vmatpush1.msra.mxu0 %v357
        %385 = vmatprep.subr.mxu0 0.0
        %386 = vmatpush1.msra.mxu0 %v358
        %387 = vmatprep.subr.mxu0 0.0
        %388 = vmatpush1.msra.mxu0 %v359
        %389 = vmatprep.subr.mxu0 0.0
        %390 = vmatpush1.msra.mxu0 %v360
        %391 = vmatprep.subr.mxu0 0.0
        %392 = vmatpush1.msra.mxu0 %v361
        %393 = vmatprep.subr.mxu0 0.0
        %394 = vmatpush1.msra.mxu0 %v362
        %395 = vmatprep.subr.mxu0 0.0
        %396 = vmatpush1.msra.mxu0 0.0
        %397 = vmatprep.subr.mxu0 0.0
        %398 = vmatpush1.msra.mxu0 0.0
        %399 = vmatprep.subr.mxu0 0.0
        %400 = vmatpush1.msra.mxu0 0.0
        %401 = vmatprep.subr.mxu0 0.0
        %402 = vmatpush1.msra.mxu0 0.0
        %403 = vmatprep.subr.mxu0 0.0
        %404 = vmatpush1.msra.mxu0 0.0
        %405 = vmatprep.subr.mxu0 0.0
        %406 = vmatpush1.msra.mxu0 0.0
        %407 = vmatprep.subr.mxu0 0.0
        %408 = vmatpush1.msra.mxu0 0.0
        %409 = vmatprep.subr.mxu0 0.0
        %410 = vmatpush1.msra.mxu0 0.0
        %411 = vmatprep.subr.mxu0 0.0
        %412 = vmatpush1.msra.mxu0 0.0
        %413 = vmatprep.subr.mxu0 0.0
        %414 = vmatpush1.msra.mxu0 0.0
        %415 = vmatprep.subr.mxu0 0.0
        %416 = vmatpush1.msra.mxu0 0.0
        %417 = vmatprep.subr.mxu0 0.0
        %418 = vmatpush1.msra.mxu0 0.0
        %419 = vmatprep.subr.mxu0 0.0
        %420 = vmatpush1.msra.mxu0 0.0
        %421 = vmatprep.subr.mxu0 0.0
        %422 = vmatpush1.msra.mxu0 0.0
        %423 = vmatprep.subr.mxu0 0.0
        %424 = vmatpush1.msra.mxu0 0.0
        %425 = vmatprep.subr.mxu0 0.0
        %426 = vmatpush1.msra.mxu0 0.0
        %427 = vmatprep.mubr.f32.mxu0 0.0
        %428 = vmatmul.mubr.f32.gmra.mrb[0].mxu0 %v339
        %v429 = vpop.f32.mrb[0].mxu0
        %v430 = vadd.f32 0.0, %v429
        %v431 = vpop.f32.mrb[0].mxu0
        %432 = vmatprep.mubr.f32.mxu0 0.0
        %433 = vmatmul.mubr.f32.gmra.mrb[0].mxu0 %v344
        %v434 = vpop.f32.mrb[0].mxu0
        %v435 = vadd.f32 0.0, %v434
        %v436 = vpop.f32.mrb[0].mxu0
        %437 = vdwg.mxu0
        %438 = vst [vmem:[%s260] sm:$0xff] %v430
        %439 = vst [vmem:[%s260 + $0x8] sm:$0xff] %v435
        %s440 = sand.u32 %s120, 1
        %s441 = scalar_lea.sflag [#allocation4], %s440
        %s442 = sand.u32 %s120, 1
        %s443 = smul.addr %s442, 16
        %s444 = scalar_lea.vmem [#allocation8], %s443
        // Predicated region
        $region45: #{tpu_custom_call.1} parent=31 // pred_check
          %p445 = pneg %p130
        $region46: #{tpu_custom_call.1} parent=31 // pred_check_branch
          %447 = sbr.rel (%p445) target = $region48
        $region47: #{tpu_custom_call.1} parent=31 // pred_region
          %s449 = ssub.s32 256, 256
          %450 = vsyncadd %s441, %s449
          %s451 = smul.addr %s28, 2
          %s452 = smul.addr %s27, 4
          %s453 = sadd.s32 %s451, %s452
          %s454 = smul.addr %s453, 128
          %s455 = scalar_lea.hbm %s3, %s454
          %s456 = sshll.u32 %s444, 4
          %s457 = int_to_ptr.vmem [resolvable:$true] %s456
          %462 = dma.vmem_to_hbm [thread:$0]  %s457, 256, %s455, %s441, 128, 128, 8
        $region48: #{tpu_custom_call.1} parent=31 // pred_fallthru
          _
      $region32: #{tpu_custom_call.1} parent=5 // pred_fallthru
        _
      %p463 = scmp.le.s32.totalorder 2, %s18
      // Predicated region
      $region49: #{tpu_custom_call.1} parent=5 // pred_check
        %p464 = pneg %p463
      $region50: #{tpu_custom_call.1} parent=5 // pred_check_branch
        %466 = sbr.rel (%p464) target = $region52
      $region51: #{tpu_custom_call.1} parent=5 // pred_region
        %s467 = ssub.s32 %s18, 2
        // Predicated region
        $region53: #{tpu_custom_call.1} parent=51 // pred_check
          %p468 = pneg %p136
        $region54: #{tpu_custom_call.1} parent=51 // pred_check_branch
          %470 = sbr.rel (%p468) target = $region56
        $region55: #{tpu_custom_call.1} parent=51 // pred_region
          %s471 = sand.u32 %s121, 1
          %s472 = scalar_lea.sflag [#allocation4], %s471
          %s473 = sand.u32 %s121, 1
          %s474 = smul.addr %s473, 16
          %s475 = scalar_lea.vmem [#allocation8], %s474
          %476 = dma.done %s472, 256
        $region56: #{tpu_custom_call.1} parent=51 // pred_fallthru
          _
      $region52: #{tpu_custom_call.1} parent=5 // pred_fallthru
        _
    $region6: #{tpu_custom_call.1} parent=1 // loop_footer
      %s22 = sadd.s32 1, %s18
    $region7: #{tpu_custom_call.1} parent=1 // loop_footer_branch
      %17 = sbr.rel target = $region3
    $region8: #{tpu_custom_call.1} parent=1 // loop_exit
      _
    %477 = vsyncpa [#allocation3], 1
    %s478 = scalar_lea.sflag [#allocation3], 1
    %479 = vsyncpa %s478, 1
    %480 = vsyncpa [#allocation6], 1
    %s481 = scalar_lea.sflag [#allocation6], 1
    %482 = vsyncpa %s481, 1
    %483 = vsyncpa [#allocation4], 1
    %s484 = scalar_lea.sflag [#allocation4], 1
    %485 = vsyncpa %s484, 1

</llo_original>
